<compile_context>
chip_gen: v7x
topology: tpu7x:2x2x1
jax: 0.10.0
libtpu: 0.0.40
codegen_flags: <defaults>
</compile_context>

<pallas_src>
import functools

import jax
import jax.numpy as jnp
from jax import lax
from jax.experimental import pallas as pl
from jax.experimental.pallas import tpu as pltpu


def _round_up(x, m):
    return ((x + m - 1) // m) * m


def _infonce_denom_kernel(zi_ref, zjt_ref, out_ref):
    """Accumulate lane-partial softmax denominators for one (TM, TN) tile.

    zi_ref : (TM, Dp)  pre-normalized queries, 1/T already folded in
    zjt_ref: (Dp, TN)  pre-normalized, pre-transposed keys
    out_ref: (TM, 128) running lane-partial sum of exp(logits) (f32)
    """
    @pl.when(pl.program_id(1) == 0)
    def _():
        out_ref[...] = jnp.zeros_like(out_ref)

    # Plain MXU matmul (keys pre-transposed in the wrapper -> no vxpose).
    logits = jnp.dot(zi_ref[...], zjt_ref[...],
                     preferred_element_type=jnp.float32)
    e = jnp.exp(logits)                      # f32 EUP; scale already folded in

    # Lane-partial accumulation: fold TN -> 128 lanes with VPU adds only;
    # the single cross-lane reduce happens once, in the wrapper.
    tn = e.shape[1]
    part = e[:, 0:128]
    for c in range(1, tn // 128):
        part = part + e[:, c * 128:(c + 1) * 128]
    out_ref[...] += part


def _choose_key_tile(batch, d_padded, itemsize, tn_cap, key_block_budget):
    """Pick (TN, Bkp): key tile width and padded key count."""
    # Largest 128-multiple key tile that keeps one key block under budget
    # (keeps double-buffered blocks well inside every generation's VMEM,
    #  including v7x's 64 MiB / 32 MiB-scoped budget).
    budget_tn = max(128, (key_block_budget // (d_padded * itemsize)) // 128 * 128)
    cap = max(128, min(tn_cap // 128 * 128, budget_tn))
    bk0 = _round_up(batch, 128)
    if bk0 <= cap:                    # keys fully resident -> single j step
        return bk0, bk0
    tn = cap
    return tn, _round_up(batch, tn)


def infonce_loss(z_i, z_j, temperature=0.5, *,
                 mxu_dtype=jnp.bfloat16, tm_cap=256, tn_cap=2048,
                 key_block_budget=4 << 20):
    """Pallas TPU implementation of InfoNCELoss.forward. Returns a () scalar."""
    assert z_i.shape == z_j.shape and z_i.ndim == 2
    B, D = z_i.shape
    inv_t = jnp.float32(1.0 / temperature)
    eps2 = jnp.float32(1e-24)                    # eps^2 for F.normalize eps=1e-12

    # ---- one-time prepass (fused XLA, O(B*D)) -------------------------------
    zi = z_i.astype(jnp.float32)
    zj = z_j.astype(jnp.float32)
    zi_n = zi * lax.rsqrt(jnp.maximum(jnp.sum(zi * zi, axis=1, keepdims=True), eps2))
    zj_n = zj * lax.rsqrt(jnp.maximum(jnp.sum(zj * zj, axis=1, keepdims=True), eps2))

    pos = jnp.sum(zi_n * zj_n, axis=1)           # (B,) positive logits, f32

    zi_q = (zi_n * inv_t).astype(mxu_dtype)      # fold 1/T into the query operand
    zj_t = zj_n.T.astype(mxu_dtype)              # one-time (D, B) transpose

    # ---- tiling / padding ---------------------------------------------------
    Dp = _round_up(D, 128)                       # lane/contraction axis
    TM = min(_round_up(tm_cap, 8), _round_up(B, 8))
    Bp = _round_up(B, TM)                        # padded query rows
    itemsize = jnp.dtype(mxu_dtype).itemsize
    TN, Bkp = _choose_key_tile(B, Dp, itemsize, tn_cap, key_block_budget)
    n_pad_keys = Bkp - B

    zi_q = jnp.pad(zi_q, ((0, Bp - B), (0, Dp - D)))
    zj_t = jnp.pad(zj_t, ((0, Dp - D), (0, Bkp - B)))

    # ---- kernel: lane-partial denominators ---------------------------------
    lane_denom = pl.pallas_call(
        _infonce_denom_kernel,
        out_shape=jax.ShapeDtypeStruct((Bp, 128), jnp.float32),
        grid_spec=pltpu.PrefetchScalarGridSpec(
            num_scalar_prefetch=0,
            grid=(Bp // TM, Bkp // TN),
            in_specs=[
                pl.BlockSpec((TM, Dp), lambda i, j: (i, 0)),   # query tile
                pl.BlockSpec((Dp, TN), lambda i, j: (0, j)),   # key panel
            ],
            # Lane-dense output block, resident across the j (reduction) axis.
            out_specs=pl.BlockSpec((TM, 128), lambda i, j: (i, 0)),
        ),
        compiler_params=pltpu.CompilerParams(
            dimension_semantics=("parallel", "arbitrary"),
        ),
    )(zi_q, zj_t)

    # ---- finalize in the wrapper (cheap O(B) XLA) ---------------------------
    # Padded key columns each contribute exactly exp(0) == 1 -> exact fix-up.
    denom = jnp.sum(lane_denom[:B], axis=1) - jnp.float32(n_pad_keys)
    # -log(exp(pos/T) / denom) == log(denom) - pos/T
    return jnp.mean(jnp.log(denom) - pos * inv_t)


def _infonce_ref(z_i, z_j, temperature=0.5):
    # Pure-JAX mirror of the PyTorch forward.
    eps = 1e-12
    zi = z_i / jnp.maximum(jnp.linalg.norm(z_i, axis=1, keepdims=True), eps)
    zj = z_j / jnp.maximum(jnp.linalg.norm(z_j, axis=1, keepdims=True), eps)
    pos = jnp.exp(jnp.sum(zi * zj, axis=1) / temperature)
    sim = jnp.exp(zi @ zj.T / temperature)
    denom = sim.sum(axis=1)
    return -jnp.mean(jnp.log(pos / denom))


if __name__ == "__main__":
    key = jax.random.PRNGKey(0)
    k1, k2, k3, k4 = jax.random.split(key, 4)

    # (1) small demo shape, exact f32-MXU path
    B, D = 8, 32
    z_i = jax.random.normal(k1, (B, D), dtype=jnp.float32)
    z_j = jax.random.normal(k2, (B, D), dtype=jnp.float32)
    loss_f32 = jax.block_until_ready(
        infonce_loss(z_i, z_j, temperature=0.5, mxu_dtype=jnp.float32))
    ref = _infonce_ref(z_i, z_j, temperature=0.5)
    assert jnp.allclose(loss_f32, ref, rtol=1e-5, atol=1e-5), (loss_f32, ref)

    # (2) default bf16-operand fast path (MXU operands bf16, f32 accumulate)
    loss_bf16 = jax.block_until_ready(infonce_loss(z_i, z_j, temperature=0.5))
    assert jnp.allclose(loss_bf16, ref, rtol=5e-2, atol=5e-2), (loss_bf16, ref)

    # (3) multi-tile grid: multiple query-row tiles, multiple key tiles, and
    #     both query-row and key-column padding corrections exercised.
    B2, D2 = 136, 48
    z_i2 = jax.random.normal(k3, (B2, D2), dtype=jnp.float32)
    z_j2 = jax.random.normal(k4, (B2, D2), dtype=jnp.float32)
    loss_tiled = jax.block_until_ready(
        infonce_loss(z_i2, z_j2, temperature=0.5,
                     mxu_dtype=jnp.float32, tm_cap=64, tn_cap=128))
    ref2 = _infonce_ref(z_i2, z_j2, temperature=0.5)
    assert jnp.allclose(loss_tiled, ref2, rtol=1e-5, atol=1e-5), (loss_tiled, ref2)

    print("KERNEL_OK")
</pallas_src>

<mosaic_0001>
module attributes {stable_mosaic.version = 11 : i64} {
  func.func @_infonce_denom_kernel(%arg0: i32, %arg1: i32, %arg2: memref<8x128xf32, #tpu.memory_space<vmem>>, %arg3: memref<128x128xf32, #tpu.memory_space<vmem>>, %arg4: memref<8x128xf32, #tpu.memory_space<vmem>>) attributes {dimension_semantics = [#tpu.dimension_semantics<parallel>, #tpu.dimension_semantics<arbitrary>], iteration_bounds = array<i64: 1, 1>, scalar_prefetch = 0 : i64, scratch_operands = 0 : i64, tpu.core_type = #tpu.core_type<tc>, window_params = [{transform_indices = @transform_0, window_bounds = array<i64: 8, 128>}, {transform_indices = @transform_1, window_bounds = array<i64: 128, 128>}, {transform_indices = @transform_2, window_bounds = array<i64: 8, 128>}]} {
    %c0_i32 = arith.constant 0 : i32
    %0 = arith.cmpi eq, %arg1, %c0_i32 : i32
    %1 = arith.extui %0 : i1 to i32
    %c0_i32_0 = arith.constant 0 : i32
    %2 = arith.cmpi ne, %1, %c0_i32_0 : i32
    scf.if %2 {
      %cst_8 = arith.constant 0.000000e+00 : f32
      %10 = vector.broadcast %cst_8 : f32 to vector<8x128xf32>
      %c0_9 = arith.constant 0 : index
      %c0_10 = arith.constant 0 : index
      %11 = vector.load %arg4[%c0_9, %c0_10] : memref<8x128xf32, #tpu.memory_space<vmem>>, vector<8x128xf32>
      tpu.vector_store %arg4[%c0_9, %c0_10], %10 {strides = array<i32>} : memref<8x128xf32, #tpu.memory_space<vmem>>, vector<8x128xf32>,
    } else {
    }
    %c0 = arith.constant 0 : index
    %c0_1 = arith.constant 0 : index
    %3 = vector.load %arg2[%c0, %c0_1] : memref<8x128xf32, #tpu.memory_space<vmem>>, vector<8x128xf32>
    %c0_2 = arith.constant 0 : index
    %c0_3 = arith.constant 0 : index
    %4 = vector.load %arg3[%c0_2, %c0_3] : memref<128x128xf32, #tpu.memory_space<vmem>>, vector<128x128xf32>
    %cst = arith.constant dense<0.000000e+00> : vector<8x128xf32>
    %5 = tpu.matmul %3, %4, %cst {dimension_numbers = #tpu.dot_dimension_numbers<[1], [0], [0], [1], [0, 0, 1, 1], [], []>} : vector<8x128xf32>, vector<128x128xf32>, vector<8x128xf32> -> vector<8x128xf32>
    %6 = math.exp %5 : vector<8x128xf32>
    %c0_4 = arith.constant 0 : index
    %c0_5 = arith.constant 0 : index
    %7 = vector.load %arg4[%c0_4, %c0_5] : memref<8x128xf32, #tpu.memory_space<vmem>>, vector<8x128xf32>
    %8 = arith.addf %7, %6 : vector<8x128xf32>
    %c0_6 = arith.constant 0 : index
    %c0_7 = arith.constant 0 : index
    %9 = vector.load %arg4[%c0_6, %c0_7] : memref<8x128xf32, #tpu.memory_space<vmem>>, vector<8x128xf32>
    tpu.vector_store %arg4[%c0_6, %c0_7], %8 {strides = array<i32>} : memref<8x128xf32, #tpu.memory_space<vmem>>, vector<8x128xf32>,
    return
  }
  func.func @transform_0(%arg0: i32, %arg1: i32) -> (i32, i32) {
    %c0_i32 = arith.constant 0 : i32
    %c0_i32_0 = arith.constant 0 : i32
    return %arg0, %c0_i32 : i32, i32
  }
  func.func @transform_1(%arg0: i32, %arg1: i32) -> (i32, i32) {
    %c0_i32 = arith.constant 0 : i32
    %c0_i32_0 = arith.constant 0 : i32
    return %c0_i32, %arg1 : i32, i32
  }
  func.func @transform_2(%arg0: i32, %arg1: i32) -> (i32, i32) {
    %c0_i32 = arith.constant 0 : i32
    %c0_i32_0 = arith.constant 0 : i32
    return %arg0, %c0_i32 : i32, i32
  }
}

</mosaic_0001>

<llo_original>
// kernel: tpu_custom_call.1
$region0: #{tpu_custom_call.1}
  #allocation0 [shape = 'u32[]', space=smem, size = 0x4, offset = 0x4, fixed_abs, tag = 'smem constant byte address 0x4 - core index']
  #allocation1 [shape = 'u32[144,128]{1,0:T(1,128)}', space=vmem, size = 0x12000, scoped, tag = 'internal scratch']
  %s0 = inlined_call_operand.hbm [shape: f32[8,128], index: 0, kind: input, shape index: {}]
  %s1 = inlined_call_operand.hbm [shape: f32[128,128], index: 1, kind: input, shape index: {}]
  %s2 = inlined_call_operand.hbm [shape: f32[8,128], index: 2, kind: output, shape index: {}]
  %s3 = sld [smem:[#allocation0]]
  $region30: #{tpu_custom_call.1} parent=0
    _
  %s5 = ssub.s32 1, %s3
  %s6 = scalar_select 0, %s5, %s3
  $region1: #{tpu_custom_call.1} parent=0
    #allocation2 [shape = 'u8[4096]{0}', space=vmem, size = 0x1000, scoped, tag = 'input window, operand 0, single buffered']
    #allocation3 [shape = 's32[1]{0}', space=sflag, size = 0x4, scoped, tag = 'scoped memory for tpu_custom_call.1']
    #allocation4 [shape = 's32[1]{0}', space=sflag, size = 0x4, scoped, tag = 'scoped memory for tpu_custom_call.1']
    #allocation5 [shape = 'u8[65536]{0}', space=vmem, size = 0x10000, scoped, tag = 'input window, operand 1, single buffered']
    #allocation6 [shape = 's32[1]{0}', space=sflag, size = 0x4, scoped, tag = 'scoped memory for tpu_custom_call.1']
    #allocation7 [shape = 'u8[4096]{0}', space=vmem, size = 0x1000, scoped, tag = 'output window, operand 0, single buffered']
    %7 = vsyncpa [#allocation3], 0
    %8 = vsyncpa [#allocation6], 0
    %9 = vsyncpa [#allocation4], 0
    // Predicated region
    $region2: #{tpu_custom_call.1} parent=1 // pred_check
      _
    $region3: #{tpu_custom_call.1} parent=1 // pred_check_branch
      %11 = sbr.rel (0) target = $region5
    $region4: #{tpu_custom_call.1} parent=1 // pred_region
      %s13 = ssub.s32 128, 128
      %14 = vsyncadd [#allocation3], %s13
      %s16 = sshll.u32 [#allocation2], 4
      %s17 = int_to_ptr.vmem [resolvable:$true] %s16
      %19 = dma.hbm_to_vmem [thread:$0]  %s0, 128, %s17, [#allocation3]
    $region5: #{tpu_custom_call.1} parent=1 // pred_fallthru
      _
    // Predicated region
    $region6: #{tpu_custom_call.1} parent=1 // pred_check
      _
    $region7: #{tpu_custom_call.1} parent=1 // pred_check_branch
      %21 = sbr.rel (0) target = $region9
    $region8: #{tpu_custom_call.1} parent=1 // pred_region
      %s23 = ssub.s32 2048, 2048
      %24 = vsyncadd [#allocation6], %s23
      %s25 = sshll.u32 [#allocation5], 4
      %s26 = int_to_ptr.vmem [resolvable:$true] %s25
      %31 = dma.hbm_to_vmem [thread:$0]  %s1, 2048, %s26, [#allocation6], 128, 128, 8
    $region9: #{tpu_custom_call.1} parent=1 // pred_fallthru
      _
    // Predicated region
    $region10: #{tpu_custom_call.1} parent=1 // pred_check
      _
    $region11: #{tpu_custom_call.1} parent=1 // pred_check_branch
      %33 = sbr.rel (0) target = $region13
    $region12: #{tpu_custom_call.1} parent=1 // pred_region
      %34 = dma.done [#allocation3], 128
    $region13: #{tpu_custom_call.1} parent=1 // pred_fallthru
      _
    // Predicated region
    $region14: #{tpu_custom_call.1} parent=1 // pred_check
      _
    $region15: #{tpu_custom_call.1} parent=1 // pred_check_branch
      %36 = sbr.rel (0) target = $region17
    $region16: #{tpu_custom_call.1} parent=1 // pred_region
      %37 = dma.done [#allocation6], 2048
    $region17: #{tpu_custom_call.1} parent=1 // pred_fallthru
      _
    %p38 = scmp.eq.s32.totalorder 0, 0
    // Predicated region
    $region18: #{tpu_custom_call.1} parent=1 // pred_check
      %p39 = pneg %p38
    $region19: #{tpu_custom_call.1} parent=1 // pred_check_branch
      %41 = sbr.rel (%p39) target = $region21
    $region20: #{tpu_custom_call.1} parent=1 // pred_region
      %42 = vst [vmem:[#allocation7] sm:$0xff] 0.0
    $region21: #{tpu_custom_call.1} parent=1 // pred_fallthru
      _
    %v43 = vld [vmem:[#allocation2] sm:$0xff]
    %v44 = vld [vmem:[#allocation5] sm:$0xff]
    %v45 = vld [vmem:[#allocation5 + $0x8] sm:$0xff]
    %v46 = vld [vmem:[#allocation5 + $0x10] sm:$0xff]
    %v47 = vld [vmem:[#allocation5 + $0x18] sm:$0xff]
    %v48 = vld [vmem:[#allocation5 + $0x20] sm:$0xff]
    %v49 = vld [vmem:[#allocation5 + $0x28] sm:$0xff]
    %v50 = vld [vmem:[#allocation5 + $0x30] sm:$0xff]
    %v51 = vld [vmem:[#allocation5 + $0x38] sm:$0xff]
    %v52 = vld [vmem:[#allocation5 + $0x40] sm:$0xff]
    %v53 = vld [vmem:[#allocation5 + $0x48] sm:$0xff]
    %v54 = vld [vmem:[#allocation5 + $0x50] sm:$0xff]
    %v55 = vld [vmem:[#allocation5 + $0x58] sm:$0xff]
    %v56 = vld [vmem:[#allocation5 + $0x60] sm:$0xff]
    %v57 = vld [vmem:[#allocation5 + $0x68] sm:$0xff]
    %v58 = vld [vmem:[#allocation5 + $0x70] sm:$0xff]
    %v59 = vld [vmem:[#allocation5 + $0x78] sm:$0xff]
    %60 = vmatprep.subr.mxu0 0.0
    %61 = vmatpush1.msra.mxu0 %v44
    %62 = vmatprep.subr.mxu0 0.0
    %63 = vmatpush1.msra.mxu0 %v45
    %64 = vmatprep.subr.mxu0 0.0
    %65 = vmatpush1.msra.mxu0 %v46
    %66 = vmatprep.subr.mxu0 0.0
    %67 = vmatpush1.msra.mxu0 %v47
    %68 = vmatprep.subr.mxu0 0.0
    %69 = vmatpush1.msra.mxu0 %v48
    %70 = vmatprep.subr.mxu0 0.0
    %71 = vmatpush1.msra.mxu0 %v49
    %72 = vmatprep.subr.mxu0 0.0
    %73 = vmatpush1.msra.mxu0 %v50
    %74 = vmatprep.subr.mxu0 0.0
    %75 = vmatpush1.msra.mxu0 %v51
    %76 = vmatprep.subr.mxu0 0.0
    %77 = vmatpush1.msra.mxu0 %v52
    %78 = vmatprep.subr.mxu0 0.0
    %79 = vmatpush1.msra.mxu0 %v53
    %80 = vmatprep.subr.mxu0 0.0
    %81 = vmatpush1.msra.mxu0 %v54
    %82 = vmatprep.subr.mxu0 0.0
    %83 = vmatpush1.msra.mxu0 %v55
    %84 = vmatprep.subr.mxu0 0.0
    %85 = vmatpush1.msra.mxu0 %v56
    %86 = vmatprep.subr.mxu0 0.0
    %87 = vmatpush1.msra.mxu0 %v57
    %88 = vmatprep.subr.mxu0 0.0
    %89 = vmatpush1.msra.mxu0 %v58
    %90 = vmatprep.subr.mxu0 0.0
    %91 = vmatpush1.msra.mxu0 %v59
    %92 = vmatprep.subr.mxu0 0.0
    %93 = vmatpush1.msra.mxu0 0.0
    %94 = vmatprep.subr.mxu0 0.0
    %95 = vmatpush1.msra.mxu0 0.0
    %96 = vmatprep.subr.mxu0 0.0
    %97 = vmatpush1.msra.mxu0 0.0
    %98 = vmatprep.subr.mxu0 0.0
    %99 = vmatpush1.msra.mxu0 0.0
    %100 = vmatprep.subr.mxu0 0.0
    %101 = vmatpush1.msra.mxu0 0.0
    %102 = vmatprep.subr.mxu0 0.0
    %103 = vmatpush1.msra.mxu0 0.0
    %104 = vmatprep.subr.mxu0 0.0
    %105 = vmatpush1.msra.mxu0 0.0
    %106 = vmatprep.subr.mxu0 0.0
    %107 = vmatpush1.msra.mxu0 0.0
    %108 = vmatprep.subr.mxu0 0.0
    %109 = vmatpush1.msra.mxu0 0.0
    %110 = vmatprep.subr.mxu0 0.0
    %111 = vmatpush1.msra.mxu0 0.0
    %112 = vmatprep.subr.mxu0 0.0
    %113 = vmatpush1.msra.mxu0 0.0
    %114 = vmatprep.subr.mxu0 0.0
    %115 = vmatpush1.msra.mxu0 0.0
    %116 = vmatprep.subr.mxu0 0.0
    %117 = vmatpush1.msra.mxu0 0.0
    %118 = vmatprep.subr.mxu0 0.0
    %119 = vmatpush1.msra.mxu0 0.0
    %120 = vmatprep.subr.mxu0 0.0
    %121 = vmatpush1.msra.mxu0 0.0
    %122 = vmatprep.subr.mxu0 0.0
    %123 = vmatpush1.msra.mxu0 0.0
    %124 = vmatprep.mubr.f32.mxu0 0.0
    %125 = vmatmul.mubr.f32.gmra.mrb[0].mxu0 %v43
    %v126 = vpop.f32.mrb[0].mxu0
    %v127 = vadd.f32 0.0, %v126
    %v128 = vpop.f32.mrb[0].mxu0
    %129 = vdwg.mxu0
    %v130 = vmul.f32 %v127, 1.442695
    %v131 = vpow.pop %v130
    %v132 = vld [vmem:[#allocation7] sm:$0xff]
    %v133 = vadd.f32 %v132, %v131
    %134 = vst [vmem:[#allocation7] sm:$0xff] %v133
    // Predicated region
    $region22: #{tpu_custom_call.1} parent=1 // pred_check
      _
    $region23: #{tpu_custom_call.1} parent=1 // pred_check_branch
      %136 = sbr.rel (0) target = $region25
    $region24: #{tpu_custom_call.1} parent=1 // pred_region
      %s138 = ssub.s32 128, 128
      %139 = vsyncadd [#allocation4], %s138
      %s141 = sshll.u32 [#allocation7], 4
      %s142 = int_to_ptr.vmem [resolvable:$true] %s141
      %144 = dma.vmem_to_hbm [thread:$0]  %s142, 128, %s2, [#allocation4]
    $region25: #{tpu_custom_call.1} parent=1 // pred_fallthru
      _
    // Predicated region
    $region26: #{tpu_custom_call.1} parent=1 // pred_check
      _
    $region27: #{tpu_custom_call.1} parent=1 // pred_check_branch
      %146 = sbr.rel (0) target = $region29
    $region28: #{tpu_custom_call.1} parent=1 // pred_region
      %147 = dma.done [#allocation4], 128
    $region29: #{tpu_custom_call.1} parent=1 // pred_fallthru
      _
    %148 = vsyncpa [#allocation3], 1
    %149 = vsyncpa [#allocation6], 1
    %150 = vsyncpa [#allocation4], 1

</llo_original>
